<compile_context>
chip_gen: v5e
topology: v5e:2x2
jax: 0.10.0
libtpu: 0.0.40
codegen_flags: <defaults>
</compile_context>

<pallas_src>
import functools

import jax
import jax.numpy as jnp
from jax.experimental import pallas as pl
from jax.experimental.pallas import tpu as pltpu

_LANES = 128
_SUBLANES = 8
# pred+tgt bytes per grid step (before double-buffering); ~12 MiB keeps the
# double-buffered working set < 32 MiB scoped VMEM on every generation while
# sitting past the measured HBM-roofline knee (~512 rows).
_INPUT_BUDGET = 12 * 1024 * 1024


def _round_up(x, m):
    return ((x + m - 1) // m) * m


def _dice_sums_kernel(pred_ref, tgt_ref, acc_ref, *, num_classes):
    """Accumulate per-class (intersection, pred-count, target-count) partials.

    pred_ref : (Bt, C, Rt, 128) logits in the input dtype.  Boundary blocks
               may contain garbage rows/batches; gated by the target sentinel.
    tgt_ref  : (Bt, Rt, 128) int32 labels, -1 marks padding / out-of-bounds.
    acc_ref  : (1, 1, 3*C, 8, 128) float32 accumulator, resident across the
               inner spatial grid axis.  Rows [0,C) intersections, [C,2C)
               argmax one-hot sums, [2C,3C) target one-hot sums.
    """
    @pl.when(pl.program_id(2) == 0)
    def _init():
        acc_ref[...] = jnp.zeros_like(acc_ref)

    t = tgt_ref[...]                               # (Bt, Rt, 128) int32
    valid = t >= 0

    # argmax over the channel axis.  softmax is monotone, so
    # argmax(softmax(x)) == argmax(x); strict '>' keeps the first maximum on
    # ties (jnp.argmax semantics).  Channels are loaded one at a time so only
    # two planes are live at once.
    best_val = pred_ref[:, 0, :, :]
    best_idx = jnp.zeros_like(t)
    for c in range(1, num_classes):
        pc = pred_ref[:, c, :, :]
        m = pc > best_val
        best_idx = jnp.where(m, jnp.int32(c), best_idx)
        best_val = jnp.where(m, pc, best_val)
    # Fold the validity mask once: padded / out-of-bounds pixels never count
    # as a prediction for any class (and never intersect: target there is -1).
    best_idx = jnp.where(valid, best_idx, jnp.int32(-1))

    # Pure element-wise accumulation (VPU adds).  Each mask is reduced to a
    # single (8,128) vreg partial via a free fold-reshape; the cross-lane
    # reduction is deferred to the JAX wrapper.
    def _part(mask):
        x = mask.astype(jnp.float32).reshape(-1, _SUBLANES, _LANES)
        return jnp.sum(x, axis=0)

    for c in range(num_classes):
        pred_c = best_idx == c
        tgt_c = t == c
        acc_ref[0, 0, c] += _part(jnp.logical_and(pred_c, tgt_c))
        acc_ref[0, 0, num_classes + c] += _part(pred_c)
        acc_ref[0, 0, 2 * num_classes + c] += _part(tgt_c)


def dice_score_2d(pred, target, num_classes=2, smooth=1.0,
                  block_b=None, block_rows=None):
    """Pallas implementation of DiceScore2D.forward for num_classes >= 2."""
    assert num_classes >= 2
    B, C, H, W = pred.shape
    assert C == num_classes
    HW = H * W
    R = pl.cdiv(HW, _LANES)                 # rows of 128 lanes per image

    # ---------------- tile selection ----------------
    if block_b is None:
        rows_per_img = _round_up(R, _SUBLANES)
        bytes_per_img = rows_per_img * _LANES * (C * pred.dtype.itemsize + 4)
        cand = max(1, min(B, _INPUT_BUDGET // max(1, bytes_per_img)))
        if B >= 2:
            # keep >= 2 batch blocks so the "parallel" batch axis can be
            # sharded over both TensorCores on dual-core chips (v7x).
            cand = max(1, min(cand, B // 2))
        # largest divisor of B <= cand: every pred batch block stays fully
        # in-bounds (no reliance on partial batch blocks in the default path).
        block_b = max(d for d in range(1, cand + 1) if B % d == 0)
    if block_rows is None:
        per_row_bytes = block_b * _LANES * (C * pred.dtype.itemsize + 4)
        block_rows = max(
            _SUBLANES,
            (_INPUT_BUDGET // per_row_bytes) // _SUBLANES * _SUBLANES)
        block_rows = min(block_rows, _round_up(R, _SUBLANES))
    assert block_rows % _SUBLANES == 0

    NB = pl.cdiv(B, block_b)
    nr_valid = pl.cdiv(R, block_rows)       # row blocks actually holding data
    # If the batch axis has only one block (B == 1), split the spatial rows
    # into 2 coarse "parallel" partials so a dual-TensorCore chip stays busy.
    NSP = 2 if (NB == 1 and nr_valid >= 2) else 1
    NRI = pl.cdiv(nr_valid, NSP)
    B_pad = NB * block_b
    R_pad = NSP * NRI * block_rows

    # ---------------- lane-dense layout ----------------
    # pred: only padded (full copy) when H*W is not a multiple of 128.  Ragged
    # spatial / batch boundary blocks are fetched partially by Pallas and the
    # garbage region is gated by the target sentinel.
    pred_flat = pred.reshape(B, C, HW)
    lane_pad = R * _LANES - HW
    if lane_pad:
        # TODO(synk): unavoidable full copy of pred when H*W % 128 != 0.
        pred_flat = jnp.pad(pred_flat, ((0, 0), (0, 0), (0, lane_pad)))
    pred_r = pred_flat.reshape(B, C, R, _LANES)

    # target: carries the -1 sentinel for every pixel / batch row the kernel
    # may touch that does not exist.
    tgt_flat = target.reshape(B, HW).astype(jnp.int32)
    spat_pad = R_pad * _LANES - HW
    if spat_pad:
        tgt_flat = jnp.pad(tgt_flat, ((0, 0), (0, spat_pad)),
                           constant_values=-1)
    if B_pad > B:
        tgt_flat = jnp.pad(tgt_flat, ((0, B_pad - B), (0, 0)),
                           constant_values=-1)
    tgt_r = tgt_flat.reshape(B_pad, R_pad, _LANES)

    # ---------------- index maps ----------------
    if NSP * NRI == nr_valid:
        def pred_row_blk(si, ri):
            return si * NRI + ri
    else:
        # clamp so no pred block origin is fully out of bounds; the duplicated
        # block is harmless (its target rows are all the -1 sentinel).
        def pred_row_blk(si, ri):
            return jnp.minimum(si * NRI + ri, nr_valid - 1)

    pred_spec = pl.BlockSpec(
        (block_b, C, block_rows, _LANES),
        lambda bi, si, ri: (bi, 0, pred_row_blk(si, ri), 0))
    tgt_spec = pl.BlockSpec(
        (block_b, block_rows, _LANES),
        lambda bi, si, ri: (bi, si * NRI + ri, 0))
    out_spec = pl.BlockSpec(
        (1, 1, 3 * C, _SUBLANES, _LANES),
        lambda bi, si, ri: (bi, si, 0, 0, 0))

    pred_blk = block_b * C * block_rows * _LANES * pred.dtype.itemsize
    tgt_blk = block_b * block_rows * _LANES * 4
    acc_blk = 3 * C * _SUBLANES * _LANES * 4
    vmem_limit = max(32 * 1024 * 1024,
                     2 * (pred_blk + tgt_blk + acc_blk) + (4 << 20))

    kernel = functools.partial(_dice_sums_kernel, num_classes=C)

    acc = pl.pallas_call(
        kernel,
        out_shape=jax.ShapeDtypeStruct((NB, NSP, 3 * C, _SUBLANES, _LANES),
                                       jnp.float32),
        grid_spec=pltpu.PrefetchScalarGridSpec(
            num_scalar_prefetch=0,
            grid=(NB, NSP, NRI),
            in_specs=[pred_spec, tgt_spec],
            out_specs=out_spec,
        ),
        compiler_params=pltpu.CompilerParams(
            dimension_semantics=("parallel", "parallel", "arbitrary"),
            vmem_limit_bytes=int(vmem_limit)),
    )(pred_r, tgt_r)

    # Single deferred cross-lane reduction + dice formula (tiny) in plain JAX.
    # Note: counts are exact integers per element (< 2^24); extremely large
    # total pixel counts (> ~16.7M per class) may round in this f32 sum, which
    # matches the f32 sums of the reference module.
    sums = jnp.sum(acc, axis=(0, 1, 3, 4)).reshape(3, C)
    inter, psum, tsum = sums[0], sums[1], sums[2]
    dice = jnp.mean((2.0 * inter + smooth) / (psum + tsum + smooth))
    return dice


def _dice_score_2d_ref(pred, target, num_classes=2, smooth=1.0):
    """Pure-JAX reference mirroring the PyTorch module (multi-class path)."""
    t = target.reshape(target.shape[0], target.shape[2], target.shape[3])
    t = t.astype(jnp.float32)
    p = jax.nn.softmax(pred.astype(jnp.float32), axis=1)
    p = jnp.argmax(p, axis=1)
    p = jax.nn.one_hot(p, num_classes, axis=1, dtype=jnp.float32)  # (B,C,H,W)
    dice = 0.0
    for c in range(num_classes):
        pred_c = p[:, c, :, :]
        tgt_c = (t == c).astype(jnp.float32)
        inter = jnp.sum(pred_c * tgt_c)
        union = jnp.sum(pred_c) + jnp.sum(tgt_c)
        dice += (2.0 * inter + smooth) / (union + smooth)
    return dice / num_classes


if __name__ == "__main__":
    key = jax.random.PRNGKey(0)
    k1, k2, k3, k4, k5, k6 = jax.random.split(key, 6)

    # Case 1: module defaults (C=2), H*W a multiple of 128 (no pred copy),
    # auto tile selection; block_b capped at B//2 -> NB=2 batch partials.
    num_classes = 2
    B, H, W = 2, 16, 16
    pred = jax.random.normal(k1, (B, num_classes, H, W), dtype=jnp.float32)
    target = jax.random.randint(k2, (B, 1, H, W), 0, num_classes,
                                dtype=jnp.int32)
    dice = jax.block_until_ready(dice_score_2d(pred, target, num_classes))
    dice_ref = _dice_score_2d_ref(pred, target, num_classes)
    assert jnp.allclose(dice, dice_ref, atol=1e-5), (dice, dice_ref)

    # Case 2: H*W not a multiple of 128 (lane padding), ragged spatial
    # boundary block of pred (OOB rows gated by target sentinel), multi-step
    # in-kernel accumulation (forced small tiles).
    num_classes = 3
    B, H, W = 3, 40, 40
    pred2 = jax.random.normal(k3, (B, num_classes, H, W), dtype=jnp.float32)
    target2 = jax.random.randint(k4, (B, 1, H, W), 0, num_classes,
                                 dtype=jnp.int32)
    dice2 = jax.block_until_ready(
        dice_score_2d(pred2, target2, num_classes, block_b=1, block_rows=8))
    dice2_ref = _dice_score_2d_ref(pred2, target2, num_classes)
    assert jnp.allclose(dice2, dice2_ref, atol=1e-5), (dice2, dice2_ref)

    # Case 3: B=1 -> spatial-partial "parallel" axis (NSP=2) with an odd
    # number of valid row blocks (exercises the clamped pred index map).
    num_classes = 2
    B, H, W = 1, 48, 48
    pred3 = jax.random.normal(k5, (B, num_classes, H, W), dtype=jnp.float32)
    target3 = jax.random.randint(k6, (B, 1, H, W), 0, num_classes,
                                 dtype=jnp.int32)
    dice3 = jax.block_until_ready(
        dice_score_2d(pred3, target3, num_classes, block_rows=8))
    dice3_ref = _dice_score_2d_ref(pred3, target3, num_classes)
    assert jnp.allclose(dice3, dice3_ref, atol=1e-5), (dice3, dice3_ref)

    print("KERNEL_OK")
</pallas_src>

<mosaic_0001>
module attributes {stable_mosaic.version = 11 : i64} {
  func.func @_dice_sums_kernel(%arg0: i32, %arg1: i32, %arg2: i32, %arg3: memref<1x2x8x128xf32, #tpu.memory_space<vmem>>, %arg4: memref<1x8x128xi32, #tpu.memory_space<vmem>>, %arg5: memref<1x1x6x8x128xf32, #tpu.memory_space<vmem>>) attributes {dimension_semantics = [#tpu.dimension_semantics<parallel>, #tpu.dimension_semantics<parallel>, #tpu.dimension_semantics<arbitrary>], iteration_bounds = array<i64: 2, 1, 1>, scalar_prefetch = 0 : i64, scratch_operands = 0 : i64, tpu.core_type = #tpu.core_type<tc>, window_params = [{transform_indices = @transform_0, window_bounds = array<i64: 1, 2, 8, 128>}, {transform_indices = @transform_1, window_bounds = array<i64: 1, 8, 128>}, {transform_indices = @transform_2, window_bounds = array<i64: 1, 1, 6, 8, 128>}]} {
    %c0_i32 = arith.constant 0 : i32
    %0 = arith.cmpi eq, %arg2, %c0_i32 : i32
    %1 = arith.extui %0 : i1 to i32
    %c0_i32_0 = arith.constant 0 : i32
    %2 = arith.cmpi ne, %1, %c0_i32_0 : i32
    scf.if %2 {
      %cst_77 = arith.constant 0.000000e+00 : f32
      %80 = vector.broadcast %cst_77 : f32 to vector<1x1x6x8x128xf32>
      %c0_78 = arith.constant 0 : index
      %c0_79 = arith.constant 0 : index
      %c0_80 = arith.constant 0 : index
      %c0_81 = arith.constant 0 : index
      %c0_82 = arith.constant 0 : index
      %81 = vector.load %arg5[%c0_78, %c0_79, %c0_80, %c0_81, %c0_82] : memref<1x1x6x8x128xf32, #tpu.memory_space<vmem>>, vector<1x1x6x8x128xf32>
      tpu.vector_store %arg5[%c0_78, %c0_79, %c0_80, %c0_81, %c0_82], %80 {strides = array<i32>} : memref<1x1x6x8x128xf32, #tpu.memory_space<vmem>>, vector<1x1x6x8x128xf32>,
    } else {
    }
    %c0 = arith.constant 0 : index
    %c0_1 = arith.constant 0 : index
    %c0_2 = arith.constant 0 : index
    %3 = vector.load %arg4[%c0, %c0_1, %c0_2] : memref<1x8x128xi32, #tpu.memory_space<vmem>>, vector<1x8x128xi32>
    %c0_i32_3 = arith.constant 0 : i32
    %4 = vector.broadcast %c0_i32_3 : i32 to vector<1x8x128xi32>
    %5 = arith.cmpi sge, %3, %4 : vector<1x8x128xi32>
    %c0_4 = arith.constant 0 : index
    %c0_5 = arith.constant 0 : index
    %c0_6 = arith.constant 0 : index
    %c0_7 = arith.constant 0 : index
    %6 = vector.load %arg3[%c0_4, %c0_5, %c0_6, %c0_7] : memref<1x2x8x128xf32, #tpu.memory_space<vmem>>, vector<1x1x8x128xf32>
    %7 = vector.shape_cast %6 : vector<1x1x8x128xf32> to vector<1x8x128xf32>
    %c0_i32_8 = arith.constant 0 : i32
    %8 = vector.broadcast %c0_i32_8 : i32 to vector<1x8x128xi32>
    %c0_9 = arith.constant 0 : index
    %c1 = arith.constant 1 : index
    %c0_10 = arith.constant 0 : index
    %c0_11 = arith.constant 0 : index
    %9 = vector.load %arg3[%c0_9, %c1, %c0_10, %c0_11] : memref<1x2x8x128xf32, #tpu.memory_space<vmem>>, vector<1x1x8x128xf32>
    %10 = vector.shape_cast %9 : vector<1x1x8x128xf32> to vector<1x8x128xf32>
    %11 = arith.cmpf ogt, %10, %7 : vector<1x8x128xf32>
    %c1_i32 = arith.constant 1 : i32
    %12 = vector.broadcast %c1_i32 : i32 to vector<1x8x128xi32>
    %13 = arith.select %11, %12, %8 : vector<1x8x128xi1>, vector<1x8x128xi32>
    %c-1_i32 = arith.constant -1 : i32
    %14 = vector.broadcast %c-1_i32 : i32 to vector<1x8x128xi32>
    %15 = arith.select %5, %13, %14 : vector<1x8x128xi1>, vector<1x8x128xi32>
    %c0_i32_12 = arith.constant 0 : i32
    %16 = vector.broadcast %c0_i32_12 : i32 to vector<1x8x128xi32>
    %17 = arith.cmpi eq, %15, %16 : vector<1x8x128xi32>
    %c0_i32_13 = arith.constant 0 : i32
    %18 = vector.broadcast %c0_i32_13 : i32 to vector<1x8x128xi32>
    %19 = arith.cmpi eq, %3, %18 : vector<1x8x128xi32>
    %c0_14 = arith.constant 0 : index
    %c0_15 = arith.constant 0 : index
    %c0_16 = arith.constant 0 : index
    %c0_17 = arith.constant 0 : index
    %c0_18 = arith.constant 0 : index
    %20 = vector.load %arg5[%c0_14, %c0_15, %c0_16, %c0_17, %c0_18] : memref<1x1x6x8x128xf32, #tpu.memory_space<vmem>>, vector<1x1x1x8x128xf32>
    %21 = vector.shape_cast %20 : vector<1x1x1x8x128xf32> to vector<8x128xf32>
    %22 = arith.andi %17, %19 : vector<1x8x128xi1>
    %23 = arith.extui %22 : vector<1x8x128xi1> to vector<1x8x128xi32>
    %24 = arith.sitofp %23 : vector<1x8x128xi32> to vector<1x8x128xf32>
    %cst = arith.constant dense<0.000000e+00> : vector<8x128xf32>
    %25 = vector.multi_reduction <add>, %24, %cst [0] : vector<1x8x128xf32> to vector<8x128xf32>
    %26 = arith.addf %21, %25 : vector<8x128xf32>
    %c0_19 = arith.constant 0 : index
    %c0_20 = arith.constant 0 : index
    %c0_21 = arith.constant 0 : index
    %c0_22 = arith.constant 0 : index
    %c0_23 = arith.constant 0 : index
    %27 = vector.load %arg5[%c0_19, %c0_20, %c0_21, %c0_22, %c0_23] : memref<1x1x6x8x128xf32, #tpu.memory_space<vmem>>, vector<1x1x1x8x128xf32>
    %28 = vector.shape_cast %27 : vector<1x1x1x8x128xf32> to vector<8x128xf32>
    %29 = vector.shape_cast %26 : vector<8x128xf32> to vector<1x1x1x8x128xf32>
    tpu.vector_store %arg5[%c0_19, %c0_20, %c0_21, %c0_22, %c0_23], %29 {strides = array<i32>} : memref<1x1x6x8x128xf32, #tpu.memory_space<vmem>>, vector<1x1x1x8x128xf32>,
    %c0_24 = arith.constant 0 : index
    %c0_25 = arith.constant 0 : index
    %c2 = arith.constant 2 : index
    %c0_26 = arith.constant 0 : index
    %c0_27 = arith.constant 0 : index
    %30 = vector.load %arg5[%c0_24, %c0_25, %c2, %c0_26, %c0_27] : memref<1x1x6x8x128xf32, #tpu.memory_space<vmem>>, vector<1x1x1x8x128xf32>
    %31 = vector.shape_cast %30 : vector<1x1x1x8x128xf32> to vector<8x128xf32>
    %32 = arith.extui %17 : vector<1x8x128xi1> to vector<1x8x128xi32>
    %33 = arith.sitofp %32 : vector<1x8x128xi32> to vector<1x8x128xf32>
    %cst_28 = arith.constant dense<0.000000e+00> : vector<8x128xf32>
    %34 = vector.multi_reduction <add>, %33, %cst_28 [0] : vector<1x8x128xf32> to vector<8x128xf32>
    %35 = arith.addf %31, %34 : vector<8x128xf32>
    %c0_29 = arith.constant 0 : index
    %c0_30 = arith.constant 0 : index
    %c2_31 = arith.constant 2 : index
    %c0_32 = arith.constant 0 : index
    %c0_33 = arith.constant 0 : index
    %36 = vector.load %arg5[%c0_29, %c0_30, %c2_31, %c0_32, %c0_33] : memref<1x1x6x8x128xf32, #tpu.memory_space<vmem>>, vector<1x1x1x8x128xf32>
    %37 = vector.shape_cast %36 : vector<1x1x1x8x128xf32> to vector<8x128xf32>
    %38 = vector.shape_cast %35 : vector<8x128xf32> to vector<1x1x1x8x128xf32>
    tpu.vector_store %arg5[%c0_29, %c0_30, %c2_31, %c0_32, %c0_33], %38 {strides = array<i32>} : memref<1x1x6x8x128xf32, #tpu.memory_space<vmem>>, vector<1x1x1x8x128xf32>,
    %c0_34 = arith.constant 0 : index
    %c0_35 = arith.constant 0 : index
    %c4 = arith.constant 4 : index
    %c0_36 = arith.constant 0 : index
    %c0_37 = arith.constant 0 : index
    %39 = vector.load %arg5[%c0_34, %c0_35, %c4, %c0_36, %c0_37] : memref<1x1x6x8x128xf32, #tpu.memory_space<vmem>>, vector<1x1x1x8x128xf32>
    %40 = vector.shape_cast %39 : vector<1x1x1x8x128xf32> to vector<8x128xf32>
    %41 = arith.extui %19 : vector<1x8x128xi1> to vector<1x8x128xi32>
    %42 = arith.sitofp %41 : vector<1x8x128xi32> to vector<1x8x128xf32>
    %cst_38 = arith.constant dense<0.000000e+00> : vector<8x128xf32>
    %43 = vector.multi_reduction <add>, %42, %cst_38 [0] : vector<1x8x128xf32> to vector<8x128xf32>
    %44 = arith.addf %40, %43 : vector<8x128xf32>
    %c0_39 = arith.constant 0 : index
    %c0_40 = arith.constant 0 : index
    %c4_41 = arith.constant 4 : index
    %c0_42 = arith.constant 0 : index
    %c0_43 = arith.constant 0 : index
    %45 = vector.load %arg5[%c0_39, %c0_40, %c4_41, %c0_42, %c0_43] : memref<1x1x6x8x128xf32, #tpu.memory_space<vmem>>, vector<1x1x1x8x128xf32>
    %46 = vector.shape_cast %45 : vector<1x1x1x8x128xf32> to vector<8x128xf32>
    %47 = vector.shape_cast %44 : vector<8x128xf32> to vector<1x1x1x8x128xf32>
    tpu.vector_store %arg5[%c0_39, %c0_40, %c4_41, %c0_42, %c0_43], %47 {strides = array<i32>} : memref<1x1x6x8x128xf32, #tpu.memory_space<vmem>>, vector<1x1x1x8x128xf32>,
    %c1_i32_44 = arith.constant 1 : i32
    %48 = vector.broadcast %c1_i32_44 : i32 to vector<1x8x128xi32>
    %49 = arith.cmpi eq, %15, %48 : vector<1x8x128xi32>
    %c1_i32_45 = arith.constant 1 : i32
    %50 = vector.broadcast %c1_i32_45 : i32 to vector<1x8x128xi32>
    %51 = arith.cmpi eq, %3, %50 : vector<1x8x128xi32>
    %c0_46 = arith.constant 0 : index
    %c0_47 = arith.constant 0 : index
    %c1_48 = arith.constant 1 : index
    %c0_49 = arith.constant 0 : index
    %c0_50 = arith.constant 0 : index
    %52 = vector.load %arg5[%c0_46, %c0_47, %c1_48, %c0_49, %c0_50] : memref<1x1x6x8x128xf32, #tpu.memory_space<vmem>>, vector<1x1x1x8x128xf32>
    %53 = vector.shape_cast %52 : vector<1x1x1x8x128xf32> to vector<8x128xf32>
    %54 = arith.andi %49, %51 : vector<1x8x128xi1>
    %55 = arith.extui %54 : vector<1x8x128xi1> to vector<1x8x128xi32>
    %56 = arith.sitofp %55 : vector<1x8x128xi32> to vector<1x8x128xf32>
    %cst_51 = arith.constant dense<0.000000e+00> : vector<8x128xf32>
    %57 = vector.multi_reduction <add>, %56, %cst_51 [0] : vector<1x8x128xf32> to vector<8x128xf32>
    %58 = arith.addf %53, %57 : vector<8x128xf32>
    %c0_52 = arith.constant 0 : index
    %c0_53 = arith.constant 0 : index
    %c1_54 = arith.constant 1 : index
    %c0_55 = arith.constant 0 : index
    %c0_56 = arith.constant 0 : index
    %59 = vector.load %arg5[%c0_52, %c0_53, %c1_54, %c0_55, %c0_56] : memref<1x1x6x8x128xf32, #tpu.memory_space<vmem>>, vector<1x1x1x8x128xf32>
    %60 = vector.shape_cast %59 : vector<1x1x1x8x128xf32> to vector<8x128xf32>
    %61 = vector.shape_cast %58 : vector<8x128xf32> to vector<1x1x1x8x128xf32>
    tpu.vector_store %arg5[%c0_52, %c0_53, %c1_54, %c0_55, %c0_56], %61 {strides = array<i32>} : memref<1x1x6x8x128xf32, #tpu.memory_space<vmem>>, vector<1x1x1x8x128xf32>,
    %c0_57 = arith.constant 0 : index
    %c0_58 = arith.constant 0 : index
    %c3 = arith.constant 3 : index
    %c0_59 = arith.constant 0 : index
    %c0_60 = arith.constant 0 : index
    %62 = vector.load %arg5[%c0_57, %c0_58, %c3, %c0_59, %c0_60] : memref<1x1x6x8x128xf32, #tpu.memory_space<vmem>>, vector<1x1x1x8x128xf32>
    %63 = vector.shape_cast %62 : vector<1x1x1x8x128xf32> to vector<8x128xf32>
    %64 = arith.extui %49 : vector<1x8x128xi1> to vector<1x8x128xi32>
    %65 = arith.sitofp %64 : vector<1x8x128xi32> to vector<1x8x128xf32>
    %cst_61 = arith.constant dense<0.000000e+00> : vector<8x128xf32>
    %66 = vector.multi_reduction <add>, %65, %cst_61 [0] : vector<1x8x128xf32> to vector<8x128xf32>
    %67 = arith.addf %63, %66 : vector<8x128xf32>
    %c0_62 = arith.constant 0 : index
    %c0_63 = arith.constant 0 : index
    %c3_64 = arith.constant 3 : index
    %c0_65 = arith.constant 0 : index
    %c0_66 = arith.constant 0 : index
    %68 = vector.load %arg5[%c0_62, %c0_63, %c3_64, %c0_65, %c0_66] : memref<1x1x6x8x128xf32, #tpu.memory_space<vmem>>, vector<1x1x1x8x128xf32>
    %69 = vector.shape_cast %68 : vector<1x1x1x8x128xf32> to vector<8x128xf32>
    %70 = vector.shape_cast %67 : vector<8x128xf32> to vector<1x1x1x8x128xf32>
    tpu.vector_store %arg5[%c0_62, %c0_63, %c3_64, %c0_65, %c0_66], %70 {strides = array<i32>} : memref<1x1x6x8x128xf32, #tpu.memory_space<vmem>>, vector<1x1x1x8x128xf32>,
    %c0_67 = arith.constant 0 : index
    %c0_68 = arith.constant 0 : index
    %c5 = arith.constant 5 : index
    %c0_69 = arith.constant 0 : index
    %c0_70 = arith.constant 0 : index
    %71 = vector.load %arg5[%c0_67, %c0_68, %c5, %c0_69, %c0_70] : memref<1x1x6x8x128xf32, #tpu.memory_space<vmem>>, vector<1x1x1x8x128xf32>
    %72 = vector.shape_cast %71 : vector<1x1x1x8x128xf32> to vector<8x128xf32>
    %73 = arith.extui %51 : vector<1x8x128xi1> to vector<1x8x128xi32>
    %74 = arith.sitofp %73 : vector<1x8x128xi32> to vector<1x8x128xf32>
    %cst_71 = arith.constant dense<0.000000e+00> : vector<8x128xf32>
    %75 = vector.multi_reduction <add>, %74, %cst_71 [0] : vector<1x8x128xf32> to vector<8x128xf32>
    %76 = arith.addf %72, %75 : vector<8x128xf32>
    %c0_72 = arith.constant 0 : index
    %c0_73 = arith.constant 0 : index
    %c5_74 = arith.constant 5 : index
    %c0_75 = arith.constant 0 : index
    %c0_76 = arith.constant 0 : index
    %77 = vector.load %arg5[%c0_72, %c0_73, %c5_74, %c0_75, %c0_76] : memref<1x1x6x8x128xf32, #tpu.memory_space<vmem>>, vector<1x1x1x8x128xf32>
    %78 = vector.shape_cast %77 : vector<1x1x1x8x128xf32> to vector<8x128xf32>
    %79 = vector.shape_cast %76 : vector<8x128xf32> to vector<1x1x1x8x128xf32>
    tpu.vector_store %arg5[%c0_72, %c0_73, %c5_74, %c0_75, %c0_76], %79 {strides = array<i32>} : memref<1x1x6x8x128xf32, #tpu.memory_space<vmem>>, vector<1x1x1x8x128xf32>,
    return
  }
  func.func @transform_0(%arg0: i32, %arg1: i32, %arg2: i32) -> (i32, i32, i32, i32) {
    %c1_i32 = arith.constant 1 : i32
    %0 = arith.muli %arg1, %c1_i32 : i32
    %1 = arith.addi %0, %arg2 : i32
    %c0_i32 = arith.constant 0 : i32
    %c0_i32_0 = arith.constant 0 : i32
    %c0_i32_1 = arith.constant 0 : i32
    return %arg0, %c0_i32, %1, %c0_i32_0 : i32, i32, i32, i32
  }
  func.func @transform_1(%arg0: i32, %arg1: i32, %arg2: i32) -> (i32, i32, i32) {
    %c1_i32 = arith.constant 1 : i32
    %0 = arith.muli %arg1, %c1_i32 : i32
    %1 = arith.addi %0, %arg2 : i32
    %c0_i32 = arith.constant 0 : i32
    %c0_i32_0 = arith.constant 0 : i32
    return %arg0, %1, %c0_i32 : i32, i32, i32
  }
  func.func @transform_2(%arg0: i32, %arg1: i32, %arg2: i32) -> (i32, i32, i32, i32, i32) {
    %c0_i32 = arith.constant 0 : i32
    %c0_i32_0 = arith.constant 0 : i32
    %c0_i32_1 = arith.constant 0 : i32
    %c0_i32_2 = arith.constant 0 : i32
    return %arg0, %arg1, %c0_i32, %c0_i32_0, %c0_i32_1 : i32, i32, i32, i32, i32
  }
}

</mosaic_0001>

<llo_original>
// kernel: tpu_custom_call.1
$region0: #{tpu_custom_call.1}
  #allocation0 [shape = 'u32[]', space=smem, size = 0x4, offset = 0x4, fixed_abs, tag = 'smem constant byte address 0x4 - core index']
  #allocation1 [shape = 'u32[72,128]{1,0:T(1,128)}', space=vmem, size = 0x9000, scoped, tag = 'internal scratch']
  #allocation8 [shape = 's32[]', space=sflag, size = 0x4, offset = 0, fixed_abs, tag = 'sflag constant byte address 0x0 - dummy sync flag']
  %s0 = inlined_call_operand.hbm [shape: f32[2,2,2,128], index: 0, kind: input, shape index: {}]
  %s1 = inlined_call_operand.hbm [shape: s32[2,8,128], index: 1, kind: input, shape index: {}]
  %s2 = inlined_call_operand.hbm [shape: f32[2,1,6,8,128], index: 2, kind: output, shape index: {}]
  %s3 = sld [smem:[#allocation0]]
  $region53: #{tpu_custom_call.1} parent=0
    _
  %s5 = ssub.s32 1, %s3
  %s6 = scalar_select 0, %s5, %s3
  $region1: #{tpu_custom_call.1} parent=0
    #allocation2 [shape = 'u8[16384]{0}', space=vmem, size = 0x4000, scoped, tag = 'input window, operand 0']
    #allocation3 [shape = 's32[2]{0}', space=sflag, size = 0x8, scoped, tag = 'scoped memory for tpu_custom_call.1']
    #allocation4 [shape = 's32[2]{0}', space=sflag, size = 0x8, scoped, tag = 'scoped memory for tpu_custom_call.1']
    #allocation5 [shape = 'u8[8192]{0}', space=vmem, size = 0x2000, scoped, tag = 'input window, operand 1']
    #allocation6 [shape = 's32[2]{0}', space=sflag, size = 0x8, scoped, tag = 'scoped memory for tpu_custom_call.1']
    #allocation7 [shape = 'u8[49152]{0}', space=vmem, size = 0xc000, scoped, tag = 'output window, operand 0']
    %7 = vsyncpa [#allocation3], 0
    %s8 = scalar_lea.sflag [#allocation3], 1
    %9 = vsyncpa %s8, 0
    %10 = vsyncpa [#allocation6], 0
    %s11 = scalar_lea.sflag [#allocation6], 1
    %12 = vsyncpa %s11, 0
    %13 = vsyncpa [#allocation4], 0
    %s14 = scalar_lea.sflag [#allocation4], 1
    %15 = vsyncpa %s14, 0
    loop: start=0, step=1, limit=4
    $region2: #{tpu_custom_call.1} parent=1 // loop_pre_header
      _
    $region3: #{tpu_custom_call.1} parent=1 // loop_header
      %s17 = sphi 0, %s21
      %p18 = scmp.ge.s32.totalorder %s17, 4
      %s24 = sphi 0, %s43
      %s25 = sphi 0, %s39
      %s26 = sphi 0, %s35
      %s27 = sphi 0, %s24
      %s28 = sphi 0, %s25
      %s29 = sphi 0, %s26
      %s30 = sphi 0, %s27
      %s31 = sphi 0, %s28
      %s32 = sphi 0, %s29
      %s50 = sphi 0, %s52
      %s53 = sphi 0, %s50
      %s54 = sphi 0, %s53
      %s70 = sphi 0, %s54
      %s80 = sphi 0, %s82
      %s83 = sphi 0, %s80
      %s84 = sphi 0, %s83
      %s100 = sphi 0, %s84
      %s108 = sphi 0, %s110
      %s111 = sphi 0, %s108
      %s112 = sphi 0, %s111
      %s128 = sphi 0, %s112
    $region4: #{tpu_custom_call.1} parent=1 // loop_header_branch
      %20 = sbr.rel (%p18) target = $region8
    $region5: #{tpu_custom_call.1} parent=1 // loop_body
      %s22 = ssub.s32 %s17, 1
      %s23 = ssub.s32 %s17, 2
      %s33 = sadd.s32 1, %s26
      %p34 = scmp.ge.s32.totalorder %s33, 1
      %s35 = scalar_select %p34, 0, %s33
      %s36 = sadd.s32 1, %s25
      %s37 = scalar_select %p34, %s36, %s25
      %p38 = scmp.ge.s32.totalorder %s37, 1
      %s39 = scalar_select %p38, 0, %s37
      %s40 = sadd.s32 1, %s24
      %s41 = scalar_select %p38, %s40, %s24
      %p42 = scmp.ge.s32.totalorder %s41, 2
      %s43 = scalar_select %p42, 0, %s41
      %s44 = sadd.s32 %s25, %s26
      %s45 = sadd.s32 %s39, %s35
      %s46 = ssub.s32 %s24, %s43
      %s47 = ssub.s32 %s44, %s45
      %s48 = sor.u32 %s46, %s47
      %p49 = scmp.eq.s32.totalorder %s48, 0
      %s51 = sadd.s32 %s50, 1
      %s52 = scalar_select %p49, %s50, %s51
      %p55 = pneg %p49
      %p56 = scmp.eq.s32.totalorder %s17, 1
      %p57 = por %p55, %p56
      %p58 = scmp.ne.s32.totalorder %s50, %s53
      %p59 = scmp.eq.s32.totalorder %s17, 0
      %p60 = por %p58, %p59
      %p61 = scmp.ne.s32.totalorder %s50, %s53
      %p62 = scmp.eq.s32.totalorder %s22, 1
      %p63 = por %p61, %p62
      %p64 = scmp.ne.s32.totalorder %s53, %s54
      %p65 = scmp.eq.s32.totalorder %s22, 0
      %p66 = por %p64, %p65
      %p67 = scmp.ne.s32.totalorder %s53, %s54
      %p68 = scmp.eq.s32.totalorder %s23, 1
      %p69 = por %p67, %p68
      %p71 = scmp.ne.s32.totalorder %s54, %s70
      %p72 = scmp.eq.s32.totalorder %s23, 0
      %p73 = por %p71, %p72
      %s74 = sadd.s32 %s25, %s26
      %s75 = sadd.s32 %s39, %s35
      %s76 = ssub.s32 %s24, %s43
      %s77 = ssub.s32 %s74, %s75
      %s78 = sor.u32 %s76, %s77
      %p79 = scmp.eq.s32.totalorder %s78, 0
      %s81 = sadd.s32 %s80, 1
      %s82 = scalar_select %p79, %s80, %s81
      %p85 = pneg %p79
      %p86 = scmp.eq.s32.totalorder %s17, 1
      %p87 = por %p85, %p86
      %p88 = scmp.ne.s32.totalorder %s80, %s83
      %p89 = scmp.eq.s32.totalorder %s17, 0
      %p90 = por %p88, %p89
      %p91 = scmp.ne.s32.totalorder %s80, %s83
      %p92 = scmp.eq.s32.totalorder %s22, 1
      %p93 = por %p91, %p92
      %p94 = scmp.ne.s32.totalorder %s83, %s84
      %p95 = scmp.eq.s32.totalorder %s22, 0
      %p96 = por %p94, %p95
      %p97 = scmp.ne.s32.totalorder %s83, %s84
      %p98 = scmp.eq.s32.totalorder %s23, 1
      %p99 = por %p97, %p98
      %p101 = scmp.ne.s32.totalorder %s84, %s100
      %p102 = scmp.eq.s32.totalorder %s23, 0
      %p103 = por %p101, %p102
      %s104 = ssub.s32 %s24, %s43
      %s105 = ssub.s32 %s25, %s39
      %s106 = sor.u32 %s104, %s105
      %p107 = scmp.eq.s32.totalorder %s106, 0
      %s109 = sadd.s32 %s108, 1
      %s110 = scalar_select %p107, %s108, %s109
      %p113 = pneg %p107
      %p114 = scmp.eq.s32.totalorder %s17, 1
      %p115 = por %p113, %p114
      %p116 = scmp.ne.s32.totalorder %s108, %s111
      %p117 = scmp.eq.s32.totalorder %s17, 0
      %p118 = por %p116, %p117
      %p119 = scmp.ne.s32.totalorder %s108, %s111
      %p120 = scmp.eq.s32.totalorder %s22, 1
      %p121 = por %p119, %p120
      %p122 = scmp.ne.s32.totalorder %s111, %s112
      %p123 = scmp.eq.s32.totalorder %s22, 0
      %p124 = por %p122, %p123
      %p125 = scmp.ne.s32.totalorder %s111, %s112
      %p126 = scmp.eq.s32.totalorder %s23, 1
      %p127 = por %p125, %p126
      %p129 = scmp.ne.s32.totalorder %s112, %s128
      %p130 = scmp.eq.s32.totalorder %s23, 0
      %p131 = por %p129, %p130
      %p132 = scmp.le.s32.totalorder 1, %s17
      %p133 = scmp.lt.s32.totalorder %s17, 3
      %p134 = pnand %p132, %p133
      %p135 = pneg %p134
      // Predicated region
      $region9: #{tpu_custom_call.1} parent=5 // pred_check
        _
      $region10: #{tpu_custom_call.1} parent=5 // pred_check_branch
        %137 = sbr.rel (%p134) target = $region12
      $region11: #{tpu_custom_call.1} parent=5 // pred_region
        %s138 = ssub.s32 %s17, 1
      $region12: #{tpu_custom_call.1} parent=5 // pred_fallthru
        _
      %p139 = scmp.lt.s32.totalorder %s17, 2
      // Predicated region
      $region13: #{tpu_custom_call.1} parent=5 // pred_check
        %p140 = pneg %p139
      $region14: #{tpu_custom_call.1} parent=5 // pred_check_branch
        %142 = sbr.rel (%p140) target = $region16
      $region15: #{tpu_custom_call.1} parent=5 // pred_region
        // Predicated region
        $region17: #{tpu_custom_call.1} parent=15 // pred_check
          %p143 = pneg %p60
        $region18: #{tpu_custom_call.1} parent=15 // pred_check_branch
          %145 = sbr.rel (%p143) target = $region20
        $region19: #{tpu_custom_call.1} parent=15 // pred_region
          #allocation9 [shape = 'u32[6]{0}', space=smem, size = 0x18, scoped, tag = 'DMA stride descriptor']
          %s146 = sand.u32 %s50, 1
          %s147 = scalar_lea.sflag [#allocation3], %s146
          %s148 = sand.u32 %s50, 1
          %s149 = smul.addr %s148, 16
          %s150 = scalar_lea.vmem [#allocation2], %s149
          %s151 = sadd.s32 %s25, %s26
          %s152 = smul.u32 4, %s151
          %s153 = ssub.s32 1, %s152
          %s154 = smul.u32 4, %s153
          %s155 = ssub.s32 16, %s154
          %s156 = sshll.u32 %s155, 4
          %157 = vsyncadd %s147, %s156
          %p158 = scmp.ne.s32.totalorder 0, %s154
          %s159 = smul.addr %s24, 2
          %s160 = sadd.s32 %s152, %s159
          %s161 = smul.addr %s160, 2
          %s162 = scalar_lea.hbm %s0, %s161
          %s163 = smul.u32 2, %s153
          %s164 = smul.u32 %s163, 2
          %s166 = sshll.u32 1, 14
          %s167 = sxor.u32 4294967295, %s166
          %s169 = sld [smem:[#allocation0]]
          %s170 = sadd.s32 2, %s169
          %s172 = sshll.u32 7, 26
          %s173 = sxor.u32 4294967295, %s172
          %s174 = sand.u32 0, %s173
          %s175 = sshll.u32 %s170, 26
          %s176 = sor.u32 %s174, %s175
          %s177 = sshll.u32 %s162, 4
          %s178 = int_to_ptr.hbm [resolvable:$true] %s177
          %s179 = sshll.u32 %s150, 4
          %s180 = int_to_ptr.vmem [resolvable:$true] %s179
          %s181 = sshll.u32 %s164, 4
          %186 = sst [smem:[#allocation9]] 32
          %s187 = scalar_lea.smem [#allocation9], 1
          %188 = sst [smem:[%s187]] 128
          %s189 = scalar_lea.smem [#allocation9], 2
          %190 = sst [smem:[%s189]] %s153
          %s191 = scalar_lea.smem [#allocation9], 3
          %192 = sst [smem:[%s191]] 32
          %s193 = scalar_lea.smem [#allocation9], 4
          %194 = sst [smem:[%s193]] 32
          %s195 = scalar_lea.smem [#allocation9], 5
          %196 = sst [smem:[%s195]] 2
          %198 = dma.general (%p158), %s178, %s181, %s180, %s147, [#allocation8], [#allocation9], %s176, 0
        $region20: #{tpu_custom_call.1} parent=15 // pred_fallthru
          _
        // Predicated region
        $region21: #{tpu_custom_call.1} parent=15 // pred_check
          %p199 = pneg %p90
        $region22: #{tpu_custom_call.1} parent=15 // pred_check_branch
          %201 = sbr.rel (%p199) target = $region24
        $region23: #{tpu_custom_call.1} parent=15 // pred_region
          %s202 = sand.u32 %s80, 1
          %s203 = scalar_lea.sflag [#allocation6], %s202
          %s204 = sand.u32 %s80, 1
          %s205 = smul.addr %s204, 8
          %s206 = scalar_lea.vmem [#allocation5], %s205
          %s207 = sadd.s32 %s25, %s26
          %209 = vsyncadd %s203, 0
          %s210 = sadd.s32 %s207, %s24
          %s211 = smul.addr %s210, 8
          %s212 = scalar_lea.hbm %s1, %s211
          %s214 = sshll.u32 %s212, 4
          %s215 = int_to_ptr.hbm [resolvable:$true] %s214
          %s216 = sshll.u32 %s206, 4
          %s217 = int_to_ptr.vmem [resolvable:$true] %s216
          %219 = dma.hbm_to_vmem [thread:$0]  %s215, 128, %s217, %s203
        $region24: #{tpu_custom_call.1} parent=15 // pred_fallthru
          _
      $region16: #{tpu_custom_call.1} parent=5 // pred_fallthru
        _
      %p220 = scmp.le.s32.totalorder 1, %s17
      %p221 = scmp.lt.s32.totalorder %s17, 3
      %p222 = pnand %p220, %p221
      %p223 = pneg %p222
      // Predicated region
      $region25: #{tpu_custom_call.1} parent=5 // pred_check
        _
      $region26: #{tpu_custom_call.1} parent=5 // pred_check_branch
        %225 = sbr.rel (%p222) target = $region28
      $region27: #{tpu_custom_call.1} parent=5 // pred_region
        %s226 = ssub.s32 %s17, 1
        %s227 = sand.u32 %s53, 1
        %s228 = scalar_lea.sflag [#allocation3], %s227
        %s229 = sand.u32 %s53, 1
        %s230 = smul.addr %s229, 16
        %s231 = scalar_lea.vmem [#allocation2], %s230
        // Predicated region
        $region29: #{tpu_custom_call.1} parent=27 // pred_check
          %p232 = pneg %p66
        $region30: #{tpu_custom_call.1} parent=27 // pred_check_branch
          %234 = sbr.rel (%p232) target = $region32
        $region31: #{tpu_custom_call.1} parent=27 // pred_region
          %236 = dma.done %s228, 256
        $region32: #{tpu_custom_call.1} parent=27 // pred_fallthru
          _
        %s237 = sand.u32 %s83, 1
        %s238 = scalar_lea.sflag [#allocation6], %s237
        %s239 = sand.u32 %s83, 1
        %s240 = smul.addr %s239, 8
        %s241 = scalar_lea.vmem [#allocation5], %s240
        // Predicated region
        $region33: #{tpu_custom_call.1} parent=27 // pred_check
          %p242 = pneg %p96
        $region34: #{tpu_custom_call.1} parent=27 // pred_check_branch
          %244 = sbr.rel (%p242) target = $region36
        $region35: #{tpu_custom_call.1} parent=27 // pred_region
          %246 = dma.done %s238, 128
        $region36: #{tpu_custom_call.1} parent=27 // pred_fallthru
          _
        %s247 = sand.u32 %s53, 1
        %s248 = scalar_lea.sflag [#allocation3], %s247
        %s249 = sand.u32 %s53, 1
        %s250 = smul.addr %s249, 16
        %s251 = scalar_lea.vmem [#allocation2], %s250
        %p252 = pneg %p66
        %p253 = pneg %p63
        %s254 = sand.u32 %s83, 1
        %s255 = scalar_lea.sflag [#allocation6], %s254
        %s256 = sand.u32 %s83, 1
        %s257 = smul.addr %s256, 8
        %s258 = scalar_lea.vmem [#allocation5], %s257
        %p259 = pneg %p96
        %p260 = pneg %p93
        %p261 = pneg %p124
        %p262 = pneg %p121
        %s263 = sand.u32 %s111, 1
        %s264 = scalar_lea.sflag [#allocation4], %s263
        %s265 = sand.u32 %s111, 1
        %s266 = smul.addr %s265, 48
        %s267 = scalar_lea.vmem [#allocation7], %s266
        %s268 = sadd.s32 %s28, %s29
        %s269 = smul.u32 4, %s268
        %s270 = ssub.s32 1, %s269
        %s271 = smul.u32 4, %s270
        %s272 = sadd.s32 %s28, %s29
        %p273 = scmp.eq.s32.totalorder %s29, 0
        // Predicated region
        $region37: #{tpu_custom_call.1} parent=27 // pred_check
          %p274 = pneg %p273
        $region38: #{tpu_custom_call.1} parent=27 // pred_check_branch
          %276 = sbr.rel (%p274) target = $region40
        $region39: #{tpu_custom_call.1} parent=27 // pred_region
          %277 = vst [vmem:[%s267] sm:$0xff] 0.0
          %278 = vst [vmem:[%s267 + $0x8] sm:$0xff] 0.0
          %279 = vst [vmem:[%s267 + $0x10] sm:$0xff] 0.0
          %280 = vst [vmem:[%s267 + $0x18] sm:$0xff] 0.0
          %281 = vst [vmem:[%s267 + $0x20] sm:$0xff] 0.0
          %282 = vst [vmem:[%s267 + $0x28] sm:$0xff] 0.0
        $region40: #{tpu_custom_call.1} parent=27 // pred_fallthru
          _
        %v283 = vld [vmem:[%s241] sm:$0xff]
        %vm284 = vcmp.ge.s32.totalorder %v283, 0
        %v285 = vld [vmem:[%s231] sm:$0xff]
        %s286 = scalar_lea.vmem %s231, 8 [#allocation2]
        %v287 = vld [vmem:[%s286] sm:$0xff]
        %vm288 = vcmp.gt.f32.partialorder %v287, %v285
        %v289 = vsel %vm288, 1, 0
        %v290 = vsel %vm284, %v289, 4294967295
        %vm291 = vcmp.eq.s32.totalorder %v290, 0
        %vm292 = vcmp.eq.s32.totalorder %v283, 0
        %v293 = vld [vmem:[%s267] sm:$0xff]
        %vm294 = vmand %vm291, %vm292
        %v295 = vsel %vm294, 1, 0
        %v296 = vcvt.s32.f32 %v295
        %v297 = vadd.f32 %v296, 0.0
        %v298 = vadd.f32 %v293, %v297
        %299 = vst [vmem:[%s267] sm:$0xff] %v298
        %s300 = scalar_lea.vmem %s267, 16 [#allocation7]
        %v301 = vld [vmem:[%s300] sm:$0xff]
        %v302 = vsel %vm291, 1, 0
        %v303 = vcvt.s32.f32 %v302
        %v304 = vadd.f32 %v303, 0.0
        %v305 = vadd.f32 %v301, %v304
        %306 = vst [vmem:[%s300] sm:$0xff] %v305
        %s307 = scalar_lea.vmem %s267, 32 [#allocation7]
        %v308 = vld [vmem:[%s307] sm:$0xff]
        %v309 = vsel %vm292, 1, 0
        %v310 = vcvt.s32.f32 %v309
        %v311 = vadd.f32 %v310, 0.0
        %v312 = vadd.f32 %v308, %v311
        %313 = vst [vmem:[%s307] sm:$0xff] %v312
        %vm314 = vcmp.eq.s32.totalorder %v290, 1
        %vm315 = vcmp.eq.s32.totalorder %v283, 1
        %s316 = scalar_lea.vmem %s267, 8 [#allocation7]
        %v317 = vld [vmem:[%s316] sm:$0xff]
        %vm318 = vmand %vm314, %vm315
        %v319 = vsel %vm318, 1, 0
        %v320 = vcvt.s32.f32 %v319
        %v321 = vadd.f32 %v320, 0.0
        %v322 = vadd.f32 %v317, %v321
        %323 = vst [vmem:[%s316] sm:$0xff] %v322
        %s324 = scalar_lea.vmem %s267, 24 [#allocation7]
        %v325 = vld [vmem:[%s324] sm:$0xff]
        %v326 = vsel %vm314, 1, 0
        %v327 = vcvt.s32.f32 %v326
        %v328 = vadd.f32 %v327, 0.0
        %v329 = vadd.f32 %v325, %v328
        %330 = vst [vmem:[%s324] sm:$0xff] %v329
        %s331 = scalar_lea.vmem %s267, 40 [#allocation7]
        %v332 = vld [vmem:[%s331] sm:$0xff]
        %v333 = vsel %vm315, 1, 0
        %v334 = vcvt.s32.f32 %v333
        %v335 = vadd.f32 %v334, 0.0
        %v336 = vadd.f32 %v332, %v335
        %337 = vst [vmem:[%s331] sm:$0xff] %v336
        %s338 = sand.u32 %s111, 1
        %s339 = scalar_lea.sflag [#allocation4], %s338
        %s340 = sand.u32 %s111, 1
        %s341 = smul.addr %s340, 48
        %s342 = scalar_lea.vmem [#allocation7], %s341
        // Predicated region
        $region41: #{tpu_custom_call.1} parent=27 // pred_check
          %p343 = pneg %p121
        $region42: #{tpu_custom_call.1} parent=27 // pred_check_branch
          %345 = sbr.rel (%p343) target = $region44
        $region43: #{tpu_custom_call.1} parent=27 // pred_region
          %347 = vsyncadd %s339, 0
          %s348 = smul.addr %s28, 6
          %s349 = smul.addr %s27, 6
          %s350 = sadd.s32 %s348, %s349
          %s351 = smul.addr %s350, 8
          %s352 = scalar_lea.hbm %s2, %s351
          %s353 = sshll.u32 %s342, 4
          %s354 = int_to_ptr.vmem [resolvable:$true] %s353
          %s355 = sshll.u32 %s352, 4
          %s356 = int_to_ptr.hbm [resolvable:$true] %s355
          %361 = dma.vmem_to_hbm [thread:$0]  %s354, 768, %s356, %s339, 128, 128, 8
        $region44: #{tpu_custom_call.1} parent=27 // pred_fallthru
          _
      $region28: #{tpu_custom_call.1} parent=5 // pred_fallthru
        _
      %p362 = scmp.le.s32.totalorder 2, %s17
      // Predicated region
      $region45: #{tpu_custom_call.1} parent=5 // pred_check
        %p363 = pneg %p362
      $region46: #{tpu_custom_call.1} parent=5 // pred_check_branch
        %365 = sbr.rel (%p363) target = $region48
      $region47: #{tpu_custom_call.1} parent=5 // pred_region
        %s366 = ssub.s32 %s17, 2
        // Predicated region
        $region49: #{tpu_custom_call.1} parent=47 // pred_check
          %p367 = pneg %p127
        $region50: #{tpu_custom_call.1} parent=47 // pred_check_branch
          %369 = sbr.rel (%p367) target = $region52
        $region51: #{tpu_custom_call.1} parent=47 // pred_region
          %s370 = sand.u32 %s112, 1
          %s371 = scalar_lea.sflag [#allocation4], %s370
          %s372 = sand.u32 %s112, 1
          %s373 = smul.addr %s372, 48
          %s374 = scalar_lea.vmem [#allocation7], %s373
          %376 = dma.done %s371, 768
        $region52: #{tpu_custom_call.1} parent=47 // pred_fallthru
          _
      $region48: #{tpu_custom_call.1} parent=5 // pred_fallthru
        _
    $region6: #{tpu_custom_call.1} parent=1 // loop_footer
      %s21 = sadd.s32 1, %s17
    $region7: #{tpu_custom_call.1} parent=1 // loop_footer_branch
      %16 = sbr.rel target = $region3
    $region8: #{tpu_custom_call.1} parent=1 // loop_exit
      _
    %377 = vsyncpa [#allocation3], 1
    %s378 = scalar_lea.sflag [#allocation3], 1
    %379 = vsyncpa %s378, 1
    %380 = vsyncpa [#allocation6], 1
    %s381 = scalar_lea.sflag [#allocation6], 1
    %382 = vsyncpa %s381, 1
    %383 = vsyncpa [#allocation4], 1
    %s384 = scalar_lea.sflag [#allocation4], 1
    %385 = vsyncpa %s384, 1

</llo_original>
